<compile_context>
chip_gen: v6e
topology: v6e:2x2x1
jax: 0.10.0
libtpu: 0.0.40
codegen_flags: <defaults>
</compile_context>

<pallas_src>
import math

import jax
import jax.numpy as jnp
from jax.experimental import pallas as pl
from jax.experimental.pallas import tpu as pltpu


# ---------------------------------------------------------------------------
# Kernel
# ---------------------------------------------------------------------------
def mlp_kernel(x_ref, w1_ref, b1_ref, w2_ref, b2_ref, w3_ref, b3_ref, o_ref):
    # x arrives f32 straight from HBM; cast to bf16 in VMEM (no wrapper pass).
    x = x_ref[...].astype(jnp.bfloat16)

    h1 = jnp.dot(x, w1_ref[...], preferred_element_type=jnp.float32)
    h1 = jnp.maximum(h1 + b1_ref[...], 0.0)          # bias (1,H) broadcasts

    h2 = jnp.dot(h1.astype(jnp.bfloat16), w2_ref[...],
                 preferred_element_type=jnp.float32)
    h2 = jnp.maximum(h2 + b2_ref[...], 0.0)

    out = jnp.dot(h2.astype(jnp.bfloat16), w3_ref[...],
                  preferred_element_type=jnp.float32)
    o_ref[...] = (out + b3_ref[...]).astype(o_ref.dtype)


# ---------------------------------------------------------------------------
# Wrapper
# ---------------------------------------------------------------------------
def _round_up(n, m):
    return ((n + m - 1) // m) * m


def _pad2(a, rows, cols):
    return jnp.pad(a, ((0, rows - a.shape[0]), (0, cols - a.shape[1])))


def neural_net_forward(x, w1, b1, w2, b2, w3, b3, *, tile_b=1024,
                       lane_multiple=128):
    """Fused forward pass of NeuralNet.

    x:  (B, input_size) float32
    w1: (input_size, hidden), b1: (1, hidden)
    w2: (hidden, hidden),     b2: (1, hidden)
    w3: (hidden, num_classes),b3: (1, num_classes)
    returns (B, num_classes) float32
    """
    B, in_f = x.shape
    hid = w1.shape[1]
    ncls = w3.shape[1]

    # --- batch tiling: fit the tile to the batch --------------------------
    if B <= tile_b:
        nsteps, tb, B_p = 1, B, B                 # single step, no row padding
    else:
        nsteps = math.ceil(B / tile_b)            # >=2 steps -> megacore on v7x
        tb = _round_up(math.ceil(B / nsteps), 8)  # sublane multiple
        B_p = tb * nsteps

    # Hidden (contraction / N) dim padded to an MXU-friendly lane multiple.
    # (Set lane_multiple=256 on v6e/v7x once layers are big enough to be
    #  MXU-bound; 128 is native on v5e and fine for these sizes.)
    hid_p = _round_up(hid, lane_multiple)

    # x keeps its true feature width and f32 dtype; only pad batch rows when
    # the grid needs it. Output keeps its true num_classes width.
    x_p = x if B_p == B else _pad2(x, B_p, in_f)

    # Weights are tiny relative to activations; pad/cast once in the wrapper
    # (in a real deployment these would be pre-converted offline).
    w1_p = _pad2(w1, in_f, hid_p).astype(jnp.bfloat16)
    w2_p = _pad2(w2, hid_p, hid_p).astype(jnp.bfloat16)
    w3_p = _pad2(w3, hid_p, ncls).astype(jnp.bfloat16)
    b1_p = _pad2(b1, 1, hid_p).astype(jnp.float32)
    b2_p = _pad2(b2, 1, hid_p).astype(jnp.float32)
    b3_p = b3.astype(jnp.float32)

    # --- cost estimate (documents the roofline, helps XLA scheduling) ------
    wbytes = (in_f * hid_p + hid_p * hid_p + hid_p * ncls) * 2 \
             + (2 * hid_p + ncls) * 4
    cost = pl.CostEstimate(
        flops=2 * B_p * (in_f * hid_p + hid_p * hid_p + hid_p * ncls),
        transcendentals=0,
        bytes_accessed=B_p * in_f * 4 + B_p * ncls * 4 + wbytes,
    )

    # --- explicit VMEM budget (single-buffered weights + 2x io tiles +
    #     f32/bf16 intermediates), capped at v7x's 64 MiB physical VMEM ------
    io_bytes = 2 * tb * in_f * 4 + 2 * tb * ncls * 4
    interm_bytes = tb * (in_f * 2 + 2 * hid_p * 4 + 2 * hid_p * 2 + ncls * 4)
    vmem_bytes = int(min(max(2 * (wbytes + io_bytes + interm_bytes),
                             8 * 1024 * 1024),
                         64 * 1024 * 1024))

    def call(single_buffer_weights):
        if single_buffer_weights:
            # Constant block index -> weights resident across batch tiles;
            # single buffer (no point double-buffering a block that never moves).
            resident = lambda shape: pl.BlockSpec(
                shape, lambda i: (0, 0), pipeline_mode=pl.Buffered(1))
        else:
            resident = lambda shape: pl.BlockSpec(shape, lambda i: (0, 0))

        return pl.pallas_call(
            mlp_kernel,
            out_shape=jax.ShapeDtypeStruct((B_p, ncls), jnp.float32),
            grid=(nsteps,),
            in_specs=[
                pl.BlockSpec((tb, in_f), lambda i: (i, 0)),
                resident(w1_p.shape), resident(b1_p.shape),
                resident(w2_p.shape), resident(b2_p.shape),
                resident(w3_p.shape), resident(b3_p.shape),
            ],
            out_specs=pl.BlockSpec((tb, ncls), lambda i: (i, 0)),
            compiler_params=pltpu.CompilerParams(
                dimension_semantics=("parallel",),
                vmem_limit_bytes=vmem_bytes),
            cost_estimate=cost,
        )(x_p, w1_p, b1_p, w2_p, b2_p, w3_p, b3_p)

    try:
        out_p = call(True)
    except Exception:
        # Fallback if this jax version rejects pipeline_mode=pl.Buffered(1).
        out_p = call(False)

    return out_p if B_p == B else out_p[:B]


# ---------------------------------------------------------------------------
# Parameter init (mimics nn.Linear shapes/init; stored as (in, out))
# ---------------------------------------------------------------------------
def init_params(key, input_size, hidden_size, num_classes):
    ks = jax.random.split(key, 6)
    s1 = 1.0 / jnp.sqrt(input_size)
    s2 = 1.0 / jnp.sqrt(hidden_size)
    w1 = jax.random.uniform(ks[0], (input_size, hidden_size), jnp.float32, -s1, s1)
    b1 = jax.random.uniform(ks[1], (1, hidden_size), jnp.float32, -s1, s1)
    w2 = jax.random.uniform(ks[2], (hidden_size, hidden_size), jnp.float32, -s2, s2)
    b2 = jax.random.uniform(ks[3], (1, hidden_size), jnp.float32, -s2, s2)
    w3 = jax.random.uniform(ks[4], (hidden_size, num_classes), jnp.float32, -s2, s2)
    b3 = jax.random.uniform(ks[5], (1, num_classes), jnp.float32, -s2, s2)
    return w1, b1, w2, b2, w3, b3


def _reference(x, w1, b1, w2, b2, w3, b3):
    h = jnp.maximum(x @ w1 + b1, 0.0)
    h = jnp.maximum(h @ w2 + b2, 0.0)
    return h @ w3 + b3


if __name__ == "__main__":
    # NOTE: at these toy shapes XLA alone would win (launch overhead + padded
    # zeros dominate); the kernel is exercised here for correctness, and the
    # tiling structure pays off at realistic batch / hidden sizes.

    # Case 1: chatbot-sized MLP (bag-of-words -> intents), single grid step.
    batch, input_size, hidden_size, num_classes = 2, 16, 32, 8
    key = jax.random.PRNGKey(0)
    kx, kp = jax.random.split(key)
    x = jax.random.normal(kx, (batch, input_size), jnp.float32)
    params = init_params(kp, input_size, hidden_size, num_classes)

    out = jax.block_until_ready(neural_net_forward(x, *params))
    ref = _reference(x, *params)
    assert out.shape == (batch, num_classes)
    assert jnp.allclose(out, ref, atol=2e-2, rtol=2e-2), (
        f"case1 max abs err {jnp.max(jnp.abs(out - ref))}")

    # Case 2: multi-step grid with batch padding (exercises the tiled path).
    b2_, in2, hid2, cls2 = 200, 64, 256, 10
    kx2, kp2 = jax.random.split(jax.random.PRNGKey(1))
    x2 = jax.random.normal(kx2, (b2_, in2), jnp.float32)
    params2 = init_params(kp2, in2, hid2, cls2)

    out2 = jax.block_until_ready(neural_net_forward(x2, *params2, tile_b=64))
    ref2 = _reference(x2, *params2)
    assert out2.shape == (b2_, cls2)
    assert jnp.allclose(out2, ref2, atol=5e-2, rtol=5e-2), (
        f"case2 max abs err {jnp.max(jnp.abs(out2 - ref2))}")

    print("KERNEL_OK")
</pallas_src>

<mosaic_0001>
module attributes {stable_mosaic.version = 11 : i64} {
  func.func @mlp_kernel(%arg0: i32, %arg1: memref<2x16xf32, #tpu.memory_space<vmem>>, %arg2: memref<16x128xbf16, #tpu.memory_space<vmem>>, %arg3: memref<1x128xf32, #tpu.memory_space<vmem>>, %arg4: memref<128x128xbf16, #tpu.memory_space<vmem>>, %arg5: memref<1x128xf32, #tpu.memory_space<vmem>>, %arg6: memref<128x8xbf16, #tpu.memory_space<vmem>>, %arg7: memref<1x8xf32, #tpu.memory_space<vmem>>, %arg8: memref<2x8xf32, #tpu.memory_space<vmem>>) attributes {dimension_semantics = [#tpu.dimension_semantics<parallel>], iteration_bounds = array<i64: 1>, scalar_prefetch = 0 : i64, scratch_operands = 0 : i64, tpu.core_type = #tpu.core_type<tc>, window_params = [{transform_indices = @transform_0, window_bounds = array<i64: 2, 16>}, {pipeline_mode = #tpu.pipeline_mode<synchronous>, transform_indices = @transform_1, window_bounds = array<i64: 16, 128>}, {pipeline_mode = #tpu.pipeline_mode<synchronous>, transform_indices = @transform_2, window_bounds = array<i64: 1, 128>}, {pipeline_mode = #tpu.pipeline_mode<synchronous>, transform_indices = @transform_3, window_bounds = array<i64: 128, 128>}, {pipeline_mode = #tpu.pipeline_mode<synchronous>, transform_indices = @transform_4, window_bounds = array<i64: 1, 128>}, {pipeline_mode = #tpu.pipeline_mode<synchronous>, transform_indices = @transform_5, window_bounds = array<i64: 128, 8>}, {pipeline_mode = #tpu.pipeline_mode<synchronous>, transform_indices = @transform_6, window_bounds = array<i64: 1, 8>}, {transform_indices = @transform_7, window_bounds = array<i64: 2, 8>}]} {
    %c0 = arith.constant 0 : index
    %c0_0 = arith.constant 0 : index
    %0 = vector.load %arg1[%c0, %c0_0] : memref<2x16xf32, #tpu.memory_space<vmem>>, vector<2x16xf32>
    %1 = arith.truncf %0 : vector<2x16xf32> to vector<2x16xbf16>
    %c0_1 = arith.constant 0 : index
    %c0_2 = arith.constant 0 : index
    %2 = vector.load %arg2[%c0_1, %c0_2] : memref<16x128xbf16, #tpu.memory_space<vmem>>, vector<16x128xbf16>
    %cst = arith.constant dense<0.000000e+00> : vector<2x128xf32>
    %3 = tpu.matmul %1, %2, %cst {dimension_numbers = #tpu.dot_dimension_numbers<[1], [0], [0], [1], [0, 0, 1, 1], [], []>} : vector<2x16xbf16>, vector<16x128xbf16>, vector<2x128xf32> -> vector<2x128xf32>
    %c0_3 = arith.constant 0 : index
    %c0_4 = arith.constant 0 : index
    %4 = vector.load %arg3[%c0_3, %c0_4] : memref<1x128xf32, #tpu.memory_space<vmem>>, vector<1x128xf32>
    %5 = vector.broadcast %4 : vector<1x128xf32> to vector<2x128xf32>
    %6 = arith.addf %3, %5 : vector<2x128xf32>
    %cst_5 = arith.constant 0.000000e+00 : f32
    %7 = vector.broadcast %cst_5 : f32 to vector<2x128xf32>
    %8 = arith.maximumf %6, %7 : vector<2x128xf32>
    %9 = arith.truncf %8 : vector<2x128xf32> to vector<2x128xbf16>
    %c0_6 = arith.constant 0 : index
    %c0_7 = arith.constant 0 : index
    %10 = vector.load %arg4[%c0_6, %c0_7] : memref<128x128xbf16, #tpu.memory_space<vmem>>, vector<128x128xbf16>
    %cst_8 = arith.constant dense<0.000000e+00> : vector<2x128xf32>
    %11 = tpu.matmul %9, %10, %cst_8 {dimension_numbers = #tpu.dot_dimension_numbers<[1], [0], [0], [1], [0, 0, 1, 1], [], []>} : vector<2x128xbf16>, vector<128x128xbf16>, vector<2x128xf32> -> vector<2x128xf32>
    %c0_9 = arith.constant 0 : index
    %c0_10 = arith.constant 0 : index
    %12 = vector.load %arg5[%c0_9, %c0_10] : memref<1x128xf32, #tpu.memory_space<vmem>>, vector<1x128xf32>
    %13 = vector.broadcast %12 : vector<1x128xf32> to vector<2x128xf32>
    %14 = arith.addf %11, %13 : vector<2x128xf32>
    %cst_11 = arith.constant 0.000000e+00 : f32
    %15 = vector.broadcast %cst_11 : f32 to vector<2x128xf32>
    %16 = arith.maximumf %14, %15 : vector<2x128xf32>
    %17 = arith.truncf %16 : vector<2x128xf32> to vector<2x128xbf16>
    %c0_12 = arith.constant 0 : index
    %c0_13 = arith.constant 0 : index
    %18 = vector.load %arg6[%c0_12, %c0_13] : memref<128x8xbf16, #tpu.memory_space<vmem>>, vector<128x8xbf16>
    %cst_14 = arith.constant dense<0.000000e+00> : vector<2x8xf32>
    %19 = tpu.matmul %17, %18, %cst_14 {dimension_numbers = #tpu.dot_dimension_numbers<[1], [0], [0], [1], [0, 0, 1, 1], [], []>} : vector<2x128xbf16>, vector<128x8xbf16>, vector<2x8xf32> -> vector<2x8xf32>
    %c0_15 = arith.constant 0 : index
    %c0_16 = arith.constant 0 : index
    %20 = vector.load %arg7[%c0_15, %c0_16] : memref<1x8xf32, #tpu.memory_space<vmem>>, vector<1x8xf32>
    %21 = vector.broadcast %20 : vector<1x8xf32> to vector<2x8xf32>
    %22 = arith.addf %19, %21 : vector<2x8xf32>
    %c0_17 = arith.constant 0 : index
    %c0_18 = arith.constant 0 : index
    %23 = vector.load %arg8[%c0_17, %c0_18] : memref<2x8xf32, #tpu.memory_space<vmem>>, vector<2x8xf32>
    tpu.vector_store %arg8[%c0_17, %c0_18], %22 {strides = array<i32>} : memref<2x8xf32, #tpu.memory_space<vmem>>, vector<2x8xf32>,
    return
  }
  func.func @transform_0(%arg0: i32) -> (i32, i32) {
    %c0_i32 = arith.constant 0 : i32
    %c0_i32_0 = arith.constant 0 : i32
    return %arg0, %c0_i32 : i32, i32
  }
  func.func @transform_1(%arg0: i32) -> (i32, i32) {
    %c0_i32 = arith.constant 0 : i32
    %c0_i32_0 = arith.constant 0 : i32
    %c0_i32_1 = arith.constant 0 : i32
    return %c0_i32, %c0_i32_0 : i32, i32
  }
  func.func @transform_2(%arg0: i32) -> (i32, i32) {
    %c0_i32 = arith.constant 0 : i32
    %c0_i32_0 = arith.constant 0 : i32
    %c0_i32_1 = arith.constant 0 : i32
    return %c0_i32, %c0_i32_0 : i32, i32
  }
  func.func @transform_3(%arg0: i32) -> (i32, i32) {
    %c0_i32 = arith.constant 0 : i32
    %c0_i32_0 = arith.constant 0 : i32
    %c0_i32_1 = arith.constant 0 : i32
    return %c0_i32, %c0_i32_0 : i32, i32
  }
  func.func @transform_4(%arg0: i32) -> (i32, i32) {
    %c0_i32 = arith.constant 0 : i32
    %c0_i32_0 = arith.constant 0 : i32
    %c0_i32_1 = arith.constant 0 : i32
    return %c0_i32, %c0_i32_0 : i32, i32
  }
  func.func @transform_5(%arg0: i32) -> (i32, i32) {
    %c0_i32 = arith.constant 0 : i32
    %c0_i32_0 = arith.constant 0 : i32
    %c0_i32_1 = arith.constant 0 : i32
    return %c0_i32, %c0_i32_0 : i32, i32
  }
  func.func @transform_6(%arg0: i32) -> (i32, i32) {
    %c0_i32 = arith.constant 0 : i32
    %c0_i32_0 = arith.constant 0 : i32
    %c0_i32_1 = arith.constant 0 : i32
    return %c0_i32, %c0_i32_0 : i32, i32
  }
  func.func @transform_7(%arg0: i32) -> (i32, i32) {
    %c0_i32 = arith.constant 0 : i32
    %c0_i32_0 = arith.constant 0 : i32
    return %arg0, %c0_i32 : i32, i32
  }
}

module attributes {stable_mosaic.version = 11 : i64} {
  func.func @mlp_kernel(%arg0: i32, %arg1: memref<2x16xf32, #tpu.memory_space<vmem>>, %arg2: memref<16x128xbf16, #tpu.memory_space<vmem>>, %arg3: memref<1x128xf32, #tpu.memory_space<vmem>>, %arg4: memref<128x128xbf16, #tpu.memory_space<vmem>>, %arg5: memref<1x128xf32, #tpu.memory_space<vmem>>, %arg6: memref<128x8xbf16, #tpu.memory_space<vmem>>, %arg7: memref<1x8xf32, #tpu.memory_space<vmem>>, %arg8: memref<2x8xf32, #tpu.memory_space<vmem>>) attributes {dimension_semantics = [#tpu.dimension_semantics<parallel>], iteration_bounds = array<i64: 1>, scalar_prefetch = 0 : i64, scratch_operands = 0 : i64, tpu.core_type = #tpu.core_type<tc>, window_params = [{transform_indices = @transform_0, window_bounds = array<i64: 2, 16>}, {pipeline_mode = #tpu.pipeline_mode<synchronous>, transform_indices = @transform_1, window_bounds = array<i64: 16, 128>}, {pipeline_mode = #tpu.pipeline_mode<synchronous>, transform_indices = @transform_2, window_bounds = array<i64: 1, 128>}, {pipeline_mode = #tpu.pipeline_mode<synchronous>, transform_indices = @transform_3, window_bounds = array<i64: 128, 128>}, {pipeline_mode = #tpu.pipeline_mode<synchronous>, transform_indices = @transform_4, window_bounds = array<i64: 1, 128>}, {pipeline_mode = #tpu.pipeline_mode<synchronous>, transform_indices = @transform_5, window_bounds = array<i64: 128, 8>}, {pipeline_mode = #tpu.pipeline_mode<synchronous>, transform_indices = @transform_6, window_bounds = array<i64: 1, 8>}, {transform_indices = @transform_7, window_bounds = array<i64: 2, 8>}]} {
    %c0 = arith.constant 0 : index
    %c0_0 = arith.constant 0 : index
    %0 = vector.load %arg1[%c0, %c0_0] : memref<2x16xf32, #tpu.memory_space<vmem>>, vector<2x16xf32>
    %1 = arith.truncf %0 : vector<2x16xf32> to vector<2x16xbf16>
    %c0_1 = arith.constant 0 : index
    %c0_2 = arith.constant 0 : index
    %2 = vector.load %arg2[%c0_1, %c0_2] : memref<16x128xbf16, #tpu.memory_space<vmem>>, vector<16x128xbf16>
    %cst = arith.constant dense<0.000000e+00> : vector<2x128xf32>
    %3 = tpu.matmul %1, %2, %cst {dimension_numbers = #tpu.dot_dimension_numbers<[1], [0], [0], [1], [0, 0, 1, 1], [], []>} : vector<2x16xbf16>, vector<16x128xbf16>, vector<2x128xf32> -> vector<2x128xf32>
    %c0_3 = arith.constant 0 : index
    %c0_4 = arith.constant 0 : index
    %4 = vector.load %arg3[%c0_3, %c0_4] : memref<1x128xf32, #tpu.memory_space<vmem>>, vector<1x128xf32>
    %5 = vector.broadcast %4 : vector<1x128xf32> to vector<2x128xf32>
    %6 = arith.addf %3, %5 : vector<2x128xf32>
    %cst_5 = arith.constant 0.000000e+00 : f32
    %7 = vector.broadcast %cst_5 : f32 to vector<2x128xf32>
    %8 = arith.maximumf %6, %7 : vector<2x128xf32>
    %9 = arith.truncf %8 : vector<2x128xf32> to vector<2x128xbf16>
    %c0_6 = arith.constant 0 : index
    %c0_7 = arith.constant 0 : index
    %10 = vector.load %arg4[%c0_6, %c0_7] : memref<128x128xbf16, #tpu.memory_space<vmem>>, vector<128x128xbf16>
    %cst_8 = arith.constant dense<0.000000e+00> : vector<2x128xf32>
    %11 = tpu.matmul %9, %10, %cst_8 {dimension_numbers = #tpu.dot_dimension_numbers<[1], [0], [0], [1], [0, 0, 1, 1], [], []>} : vector<2x128xbf16>, vector<128x128xbf16>, vector<2x128xf32> -> vector<2x128xf32>
    %c0_9 = arith.constant 0 : index
    %c0_10 = arith.constant 0 : index
    %12 = vector.load %arg5[%c0_9, %c0_10] : memref<1x128xf32, #tpu.memory_space<vmem>>, vector<1x128xf32>
    %13 = vector.broadcast %12 : vector<1x128xf32> to vector<2x128xf32>
    %14 = arith.addf %11, %13 : vector<2x128xf32>
    %cst_11 = arith.constant 0.000000e+00 : f32
    %15 = vector.broadcast %cst_11 : f32 to vector<2x128xf32>
    %16 = arith.maximumf %14, %15 : vector<2x128xf32>
    %17 = arith.truncf %16 : vector<2x128xf32> to vector<2x128xbf16>
    %c0_12 = arith.constant 0 : index
    %c0_13 = arith.constant 0 : index
    %18 = vector.load %arg6[%c0_12, %c0_13] : memref<128x8xbf16, #tpu.memory_space<vmem>>, vector<128x8xbf16>
    %cst_14 = arith.constant dense<0.000000e+00> : vector<2x8xf32>
    %19 = tpu.matmul %17, %18, %cst_14 {dimension_numbers = #tpu.dot_dimension_numbers<[1], [0], [0], [1], [0, 0, 1, 1], [], []>} : vector<2x128xbf16>, vector<128x8xbf16>, vector<2x8xf32> -> vector<2x8xf32>
    %c0_15 = arith.constant 0 : index
    %c0_16 = arith.constant 0 : index
    %20 = vector.load %arg7[%c0_15, %c0_16] : memref<1x8xf32, #tpu.memory_space<vmem>>, vector<1x8xf32>
    %21 = vector.broadcast %20 : vector<1x8xf32> to vector<2x8xf32>
    %22 = arith.addf %19, %21 : vector<2x8xf32>
    %c0_17 = arith.constant 0 : index
    %c0_18 = arith.constant 0 : index
    %23 = vector.load %arg8[%c0_17, %c0_18] : memref<2x8xf32, #tpu.memory_space<vmem>>, vector<2x8xf32>
    tpu.vector_store %arg8[%c0_17, %c0_18], %22 {strides = array<i32>} : memref<2x8xf32, #tpu.memory_space<vmem>>, vector<2x8xf32>,
    return
  }
  func.func @transform_0(%arg0: i32) -> (i32, i32) {
    %c0_i32 = arith.constant 0 : i32
    %c0_i32_0 = arith.constant 0 : i32
    return %arg0, %c0_i32 : i32, i32
  }
  func.func @transform_1(%arg0: i32) -> (i32, i32) {
    %c0_i32 = arith.constant 0 : i32
    %c0_i32_0 = arith.constant 0 : i32
    %c0_i32_1 = arith.constant 0 : i32
    return %c0_i32, %c0_i32_0 : i32, i32
  }
  func.func @transform_2(%arg0: i32) -> (i32, i32) {
    %c0_i32 = arith.constant 0 : i32
    %c0_i32_0 = arith.constant 0 : i32
    %c0_i32_1 = arith.constant 0 : i32
    return %c0_i32, %c0_i32_0 : i32, i32
  }
  func.func @transform_3(%arg0: i32) -> (i32, i32) {
    %c0_i32 = arith.constant 0 : i32
    %c0_i32_0 = arith.constant 0 : i32
    %c0_i32_1 = arith.constant 0 : i32
    return %c0_i32, %c0_i32_0 : i32, i32
  }
  func.func @transform_4(%arg0: i32) -> (i32, i32) {
    %c0_i32 = arith.constant 0 : i32
    %c0_i32_0 = arith.constant 0 : i32
    %c0_i32_1 = arith.constant 0 : i32
    return %c0_i32, %c0_i32_0 : i32, i32
  }
  func.func @transform_5(%arg0: i32) -> (i32, i32) {
    %c0_i32 = arith.constant 0 : i32
    %c0_i32_0 = arith.constant 0 : i32
    %c0_i32_1 = arith.constant 0 : i32
    return %c0_i32, %c0_i32_0 : i32, i32
  }
  func.func @transform_6(%arg0: i32) -> (i32, i32) {
    %c0_i32 = arith.constant 0 : i32
    %c0_i32_0 = arith.constant 0 : i32
    %c0_i32_1 = arith.constant 0 : i32
    return %c0_i32, %c0_i32_0 : i32, i32
  }
  func.func @transform_7(%arg0: i32) -> (i32, i32) {
    %c0_i32 = arith.constant 0 : i32
    %c0_i32_0 = arith.constant 0 : i32
    return %arg0, %c0_i32 : i32, i32
  }
}

</mosaic_0001>

<llo_original>
// kernel: tpu_custom_call.1
$region0: #{tpu_custom_call.1}
  #allocation0 [shape = 'u32[]', space=smem, size = 0x4, offset = 0x4, fixed_abs, tag = 'smem constant byte address 0x4 - core index']
  #allocation1 [shape = 'u32[144,128]{1,0:T(1,128)}', space=vmem, size = 0x12000, scoped, tag = 'internal scratch']
  %s0 = inlined_call_operand.hbm [shape: f32[2,16], index: 0, kind: input, shape index: {}]
  %s1 = inlined_call_operand.vmem [shape: bf16[16,128], index: 1, kind: input, shape index: {}]
  %s2 = inlined_call_operand.vmem [shape: f32[1,128], index: 2, kind: input, shape index: {}]
  %s3 = inlined_call_operand.vmem [shape: bf16[128,128], index: 3, kind: input, shape index: {}]
  %s4 = inlined_call_operand.hbm [shape: f32[1,128], index: 4, kind: input, shape index: {}]
  %s5 = inlined_call_operand.vmem [shape: bf16[128,8], index: 5, kind: input, shape index: {}]
  %s6 = inlined_call_operand.vmem [shape: f32[1,8], index: 6, kind: input, shape index: {}]
  %s7 = inlined_call_operand.hbm [shape: f32[2,8], index: 7, kind: output, shape index: {}]
  %s8 = sld [smem:[#allocation0]]
  $region46: #{tpu_custom_call.1} parent=0
    _
  %s10 = ssub.s32 1, %s8
  %s11 = scalar_select 0, %s10, %s8
  $region1: #{tpu_custom_call.1} parent=0
    #allocation2 [shape = 'u8[1024]{0}', space=vmem, size = 0x400, scoped, tag = 'input window, operand 0, single buffered']
    #allocation3 [shape = 's32[1]{0}', space=sflag, size = 0x4, scoped, tag = 'scoped memory for tpu_custom_call.1']
    #allocation4 [shape = 's32[1]{0}', space=sflag, size = 0x4, scoped, tag = 'scoped memory for tpu_custom_call.1']
    #allocation5 [shape = 'u8[512]{0}', space=vmem, size = 0x400, scoped, tag = 'input window, operand 4, single buffered']
    #allocation6 [shape = 's32[1]{0}', space=sflag, size = 0x4, scoped, tag = 'scoped memory for tpu_custom_call.1']
    #allocation7 [shape = 'u8[1024]{0}', space=vmem, size = 0x400, scoped, tag = 'output window, operand 0, single buffered']
    %12 = vsyncpa [#allocation3], 0
    %13 = vsyncpa [#allocation6], 0
    %14 = vsyncpa [#allocation4], 0
    // Predicated region
    $region2: #{tpu_custom_call.1} parent=1 // pred_check
      _
    $region3: #{tpu_custom_call.1} parent=1 // pred_check_branch
      %16 = sbr.rel (0) target = $region5
    $region4: #{tpu_custom_call.1} parent=1 // pred_region
      %s18 = ssub.s32 32, 32
      %19 = vsyncadd [#allocation3], %s18
      %s21 = sshll.u32 [#allocation2], 4
      %s22 = int_to_ptr.vmem [resolvable:$true] %s21
      %24 = dma.hbm_to_vmem [thread:$0]  %s0, 32, %s22, [#allocation3]
    $region5: #{tpu_custom_call.1} parent=1 // pred_fallthru
      _
    // Predicated region
    $region6: #{tpu_custom_call.1} parent=1 // pred_check
      _
    $region7: #{tpu_custom_call.1} parent=1 // pred_check_branch
      %26 = sbr.rel (0) target = $region9
    $region8: #{tpu_custom_call.1} parent=1 // pred_region
      _
    $region9: #{tpu_custom_call.1} parent=1 // pred_fallthru
      _
    // Predicated region
    $region10: #{tpu_custom_call.1} parent=1 // pred_check
      _
    $region11: #{tpu_custom_call.1} parent=1 // pred_check_branch
      %28 = sbr.rel (0) target = $region13
    $region12: #{tpu_custom_call.1} parent=1 // pred_region
      _
    $region13: #{tpu_custom_call.1} parent=1 // pred_fallthru
      _
    // Predicated region
    $region14: #{tpu_custom_call.1} parent=1 // pred_check
      _
    $region15: #{tpu_custom_call.1} parent=1 // pred_check_branch
      %30 = sbr.rel (0) target = $region17
    $region16: #{tpu_custom_call.1} parent=1 // pred_region
      _
    $region17: #{tpu_custom_call.1} parent=1 // pred_fallthru
      _
    // Predicated region
    $region18: #{tpu_custom_call.1} parent=1 // pred_check
      _
    $region19: #{tpu_custom_call.1} parent=1 // pred_check_branch
      %32 = sbr.rel (0) target = $region21
    $region20: #{tpu_custom_call.1} parent=1 // pred_region
      %s34 = ssub.s32 16, 16
      %35 = vsyncadd [#allocation6], %s34
      %s37 = sshll.u32 [#allocation5], 4
      %s38 = int_to_ptr.vmem [resolvable:$true] %s37
      %40 = dma.hbm_to_vmem [thread:$0]  %s4, 16, %s38, [#allocation6]
    $region21: #{tpu_custom_call.1} parent=1 // pred_fallthru
      _
    // Predicated region
    $region22: #{tpu_custom_call.1} parent=1 // pred_check
      _
    $region23: #{tpu_custom_call.1} parent=1 // pred_check_branch
      %42 = sbr.rel (0) target = $region25
    $region24: #{tpu_custom_call.1} parent=1 // pred_region
      _
    $region25: #{tpu_custom_call.1} parent=1 // pred_fallthru
      _
    // Predicated region
    $region26: #{tpu_custom_call.1} parent=1 // pred_check
      _
    $region27: #{tpu_custom_call.1} parent=1 // pred_check_branch
      %44 = sbr.rel (0) target = $region29
    $region28: #{tpu_custom_call.1} parent=1 // pred_region
      _
    $region29: #{tpu_custom_call.1} parent=1 // pred_fallthru
      _
    // Predicated region
    $region30: #{tpu_custom_call.1} parent=1 // pred_check
      _
    $region31: #{tpu_custom_call.1} parent=1 // pred_check_branch
      %46 = sbr.rel (0) target = $region33
    $region32: #{tpu_custom_call.1} parent=1 // pred_region
      %47 = dma.done [#allocation3], 32
    $region33: #{tpu_custom_call.1} parent=1 // pred_fallthru
      _
    // Predicated region
    $region34: #{tpu_custom_call.1} parent=1 // pred_check
      _
    $region35: #{tpu_custom_call.1} parent=1 // pred_check_branch
      %49 = sbr.rel (0) target = $region37
    $region36: #{tpu_custom_call.1} parent=1 // pred_region
      %50 = dma.done [#allocation6], 16
    $region37: #{tpu_custom_call.1} parent=1 // pred_fallthru
      _
    %v52 = vld [vmem:[#allocation2] sm:$0x3]
    %v53 = vpack.c.bf16 %v52, %v52
    %v54 = vld [vmem:[%s1] sm:$0xf]
    %v55 = vld [vmem:[%s1 + $0x4] sm:$0xf]
    %v56 = vld [vmem:[%s2] sm:$0x1]
    %v58 = vlaneseq
    %v59 = vshrl.u32 %v58, 7
    %v60 = vsub.s32 0, %v59
    %v61 = vrot.slane %v56, %v60
    %v65 = vunpack.c.l.b16 %v54
    %v66 = vunpack.c.l.b16 %v55
    %v67 = vpack.c.b16 %v66, %v65
    %vm69 = vcmask 130048
    %v71 = vsel %vm69, %v53, 0
    %73 = vmatprep.subr.bf16.mxu0 0
    %74 = vmatpush1.bf16.msra.mxu0 0
    %75 = vmatprep.subr.bf16.mxu0 0
    %76 = vmatpush1.bf16.msra.mxu0 0
    %77 = vmatprep.subr.bf16.mxu0 0
    %78 = vmatpush1.bf16.msra.mxu0 0
    %79 = vmatprep.subr.bf16.mxu0 0
    %80 = vmatpush1.bf16.msra.mxu0 0
    %81 = vmatprep.subr.bf16.mxu0 0
    %82 = vmatpush1.bf16.msra.mxu0 0
    %83 = vmatprep.subr.bf16.mxu0 0
    %84 = vmatpush1.bf16.msra.mxu0 0
    %85 = vmatprep.subr.bf16.mxu0 0
    %86 = vmatpush1.bf16.msra.mxu0 0
    %87 = vmatprep.subr.bf16.mxu0 0
    %88 = vmatpush1.bf16.msra.mxu0 %v67
    %89 = vmatprep.subr.bf16.mxu0 0
    %90 = vmatpush2.bf16.msra.mxu0 0
    %91 = vmatprep.subr.bf16.mxu0 0
    %92 = vmatpush2.bf16.msra.mxu0 0
    %93 = vmatprep.subr.bf16.mxu0 0
    %94 = vmatpush2.bf16.msra.mxu0 0
    %95 = vmatprep.subr.bf16.mxu0 0
    %96 = vmatpush2.bf16.msra.mxu0 0
    %97 = vmatprep.subr.bf16.mxu0 0
    %98 = vmatpush2.bf16.msra.mxu0 0
    %99 = vmatprep.subr.bf16.mxu0 0
    %100 = vmatpush2.bf16.msra.mxu0 0
    %101 = vmatprep.subr.bf16.mxu0 0
    %102 = vmatpush2.bf16.msra.mxu0 0
    %103 = vmatprep.subr.bf16.mxu0 0
    %104 = vmatpush2.bf16.msra.mxu0 0
    %105 = vmatprep.mubr.bf16.mxu0 0
    %106 = vmatmul.mubr.bf16.gmra.mxu0 %v71
    %v107 = vpop.f32.mrf.mxu0
    %v108 = vadd.f32 %v61, %v107
    %v109 = vpop.f32.mrf.mxu0
    %v110 = vpop.f32.mrf.mxu0
    %v111 = vpop.f32.mrf.mxu0
    %112 = vdwg.mxu0
    %v113 = vmax.f32 %v108, 0.0
    %v114 = vpack.c.bf16 %v113, %v113
    %v115 = vld [vmem:[%s3] sm:$0xf]
    %v116 = vld [vmem:[%s3 + $0x4] sm:$0xf]
    %v117 = vld [vmem:[%s3 + $0x8] sm:$0xf]
    %v118 = vld [vmem:[%s3 + $0xc] sm:$0xf]
    %v119 = vld [vmem:[%s3 + $0x10] sm:$0xf]
    %v120 = vld [vmem:[%s3 + $0x14] sm:$0xf]
    %v121 = vld [vmem:[%s3 + $0x18] sm:$0xf]
    %v122 = vld [vmem:[%s3 + $0x1c] sm:$0xf]
    %v123 = vld [vmem:[%s3 + $0x20] sm:$0xf]
    %v124 = vld [vmem:[%s3 + $0x24] sm:$0xf]
    %v125 = vld [vmem:[%s3 + $0x28] sm:$0xf]
    %v126 = vld [vmem:[%s3 + $0x2c] sm:$0xf]
    %v127 = vld [vmem:[%s3 + $0x30] sm:$0xf]
    %v128 = vld [vmem:[%s3 + $0x34] sm:$0xf]
    %v129 = vld [vmem:[%s3 + $0x38] sm:$0xf]
    %v130 = vld [vmem:[%s3 + $0x3c] sm:$0xf]
    %v131 = vld [vmem:[#allocation5] sm:$0x1]
    %v133 = vlaneseq
    %v134 = vshrl.u32 %v133, 7
    %v135 = vsub.s32 0, %v134
    %v136 = vrot.slane %v131, %v135
    %v154 = vunpack.c.l.b16 %v115
    %v155 = vunpack.c.l.b16 %v116
    %v156 = vunpack.c.l.b16 %v117
    %v157 = vunpack.c.l.b16 %v118
    %v158 = vunpack.c.l.b16 %v119
    %v159 = vunpack.c.l.b16 %v120
    %v160 = vunpack.c.l.b16 %v121
    %v161 = vunpack.c.l.b16 %v122
    %v162 = vunpack.c.l.b16 %v123
    %v163 = vunpack.c.l.b16 %v124
    %v164 = vunpack.c.l.b16 %v125
    %v165 = vunpack.c.l.b16 %v126
    %v166 = vunpack.c.l.b16 %v127
    %v167 = vunpack.c.l.b16 %v128
    %v168 = vunpack.c.l.b16 %v129
    %v169 = vunpack.c.l.b16 %v130
    %v170 = vpack.c.b16 %v155, %v154
    %v171 = vpack.c.b16 %v157, %v156
    %v172 = vpack.c.b16 %v159, %v158
    %v173 = vpack.c.b16 %v161, %v160
    %v174 = vpack.c.b16 %v163, %v162
    %v175 = vpack.c.b16 %v165, %v164
    %v176 = vpack.c.b16 %v167, %v166
    %v177 = vpack.c.b16 %v169, %v168
    %186 = vmatprep.subr.bf16.mxu0 0
    %187 = vmatpush1.bf16.msra.mxu0 %v177
    %188 = vmatprep.subr.bf16.mxu0 0
    %189 = vmatpush1.bf16.msra.mxu0 %v176
    %190 = vmatprep.subr.bf16.mxu0 0
    %191 = vmatpush1.bf16.msra.mxu0 %v175
    %192 = vmatprep.subr.bf16.mxu0 0
    %193 = vmatpush1.bf16.msra.mxu0 %v174
    %194 = vmatprep.subr.bf16.mxu0 0
    %195 = vmatpush1.bf16.msra.mxu0 %v173
    %196 = vmatprep.subr.bf16.mxu0 0
    %197 = vmatpush1.bf16.msra.mxu0 %v172
    %198 = vmatprep.subr.bf16.mxu0 0
    %199 = vmatpush1.bf16.msra.mxu0 %v171
    %200 = vmatprep.subr.bf16.mxu0 0
    %201 = vmatpush1.bf16.msra.mxu0 %v170
    %202 = vmatprep.subr.bf16.mxu0 0
    %203 = vmatpush2.bf16.msra.mxu0 0
    %204 = vmatprep.subr.bf16.mxu0 0
    %205 = vmatpush2.bf16.msra.mxu0 0
    %206 = vmatprep.subr.bf16.mxu0 0
    %207 = vmatpush2.bf16.msra.mxu0 0
    %208 = vmatprep.subr.bf16.mxu0 0
    %209 = vmatpush2.bf16.msra.mxu0 0
    %210 = vmatprep.subr.bf16.mxu0 0
    %211 = vmatpush2.bf16.msra.mxu0 0
    %212 = vmatprep.subr.bf16.mxu0 0
    %213 = vmatpush2.bf16.msra.mxu0 0
    %214 = vmatprep.subr.bf16.mxu0 0
    %215 = vmatpush2.bf16.msra.mxu0 0
    %216 = vmatprep.subr.bf16.mxu0 0
    %217 = vmatpush2.bf16.msra.mxu0 0
    %218 = vmatprep.mubr.bf16.mxu0 0
    %219 = vmatmul.mubr.bf16.gmra.mxu0 %v114
    %v220 = vpop.f32.mrf.mxu0
    %v221 = vadd.f32 %v136, %v220
    %v222 = vpop.f32.mrf.mxu0
    %v223 = vpop.f32.mrf.mxu0
    %v224 = vpop.f32.mrf.mxu0
    %225 = vdwg.mxu0
    %v226 = vmax.f32 %v221, 0.0
    %v227 = vpack.c.bf16 %v226, %v226
    %v228 = vld [vmem:[%s5] sm:$0xf]
    %v229 = vld [vmem:[%s5 + $0x4] sm:$0xf]
    %v230 = vld [vmem:[%s5 + $0x8] sm:$0xf]
    %v231 = vld [vmem:[%s5 + $0xc] sm:$0xf]
    %v232 = vld [vmem:[%s5 + $0x10] sm:$0xf]
    %v233 = vld [vmem:[%s5 + $0x14] sm:$0xf]
    %v234 = vld [vmem:[%s5 + $0x18] sm:$0xf]
    %v235 = vld [vmem:[%s5 + $0x1c] sm:$0xf]
    %v236 = vld [vmem:[%s5 + $0x20] sm:$0xf]
    %v237 = vld [vmem:[%s5 + $0x24] sm:$0xf]
    %v238 = vld [vmem:[%s5 + $0x28] sm:$0xf]
    %v239 = vld [vmem:[%s5 + $0x2c] sm:$0xf]
    %v240 = vld [vmem:[%s5 + $0x30] sm:$0xf]
    %v241 = vld [vmem:[%s5 + $0x34] sm:$0xf]
    %v242 = vld [vmem:[%s5 + $0x38] sm:$0xf]
    %v243 = vld [vmem:[%s5 + $0x3c] sm:$0xf]
    %v244 = vld [vmem:[%s6] sm:$0x1]
    %v246 = vlaneseq
    %v247 = vshrl.u32 %v246, 7
    %v248 = vsub.s32 0, %v247
    %v249 = vrot.slane %v244, %v248
    %v267 = vunpack.c.l.b16 %v228
    %v268 = vunpack.c.l.b16 %v229
    %v269 = vunpack.c.l.b16 %v230
    %v270 = vunpack.c.l.b16 %v231
    %v271 = vunpack.c.l.b16 %v232
    %v272 = vunpack.c.l.b16 %v233
    %v273 = vunpack.c.l.b16 %v234
    %v274 = vunpack.c.l.b16 %v235
    %v275 = vunpack.c.l.b16 %v236
    %v276 = vunpack.c.l.b16 %v237
    %v277 = vunpack.c.l.b16 %v238
    %v278 = vunpack.c.l.b16 %v239
    %v279 = vunpack.c.l.b16 %v240
    %v280 = vunpack.c.l.b16 %v241
    %v281 = vunpack.c.l.b16 %v242
    %v282 = vunpack.c.l.b16 %v243
    %v283 = vpack.c.b16 %v268, %v267
    %v284 = vpack.c.b16 %v270, %v269
    %v285 = vpack.c.b16 %v272, %v271
    %v286 = vpack.c.b16 %v274, %v273
    %v287 = vpack.c.b16 %v276, %v275
    %v288 = vpack.c.b16 %v278, %v277
    %v289 = vpack.c.b16 %v280, %v279
    %v290 = vpack.c.b16 %v282, %v281
    %299 = vmatprep.subr.bf16.mxu0 0
    %300 = vmatpush1.bf16.msra.mxu0 %v290
    %301 = vmatprep.subr.bf16.mxu0 0
    %302 = vmatpush1.bf16.msra.mxu0 %v289
    %303 = vmatprep.subr.bf16.mxu0 0
    %304 = vmatpush1.bf16.msra.mxu0 %v288
    %305 = vmatprep.subr.bf16.mxu0 0
    %306 = vmatpush1.bf16.msra.mxu0 %v287
    %307 = vmatprep.subr.bf16.mxu0 0
    %308 = vmatpush1.bf16.msra.mxu0 %v286
    %309 = vmatprep.subr.bf16.mxu0 0
    %310 = vmatpush1.bf16.msra.mxu0 %v285
    %311 = vmatprep.subr.bf16.mxu0 0
    %312 = vmatpush1.bf16.msra.mxu0 %v284
    %313 = vmatprep.subr.bf16.mxu0 0
    %314 = vmatpush1.bf16.msra.mxu0 %v283
    %315 = vmatprep.subr.bf16.mxu0 0
    %316 = vmatpush2.bf16.msra.mxu0 0
    %317 = vmatprep.subr.bf16.mxu0 0
    %318 = vmatpush2.bf16.msra.mxu0 0
    %319 = vmatprep.subr.bf16.mxu0 0
    %320 = vmatpush2.bf16.msra.mxu0 0
    %321 = vmatprep.subr.bf16.mxu0 0
    %322 = vmatpush2.bf16.msra.mxu0 0
    %323 = vmatprep.subr.bf16.mxu0 0
    %324 = vmatpush2.bf16.msra.mxu0 0
    %325 = vmatprep.subr.bf16.mxu0 0
    %326 = vmatpush2.bf16.msra.mxu0 0
    %327 = vmatprep.subr.bf16.mxu0 0
    %328 = vmatpush2.bf16.msra.mxu0 0
    %329 = vmatprep.subr.bf16.mxu0 0
    %330 = vmatpush2.bf16.msra.mxu0 0
    %331 = vmatprep.mubr.bf16.mxu0 0
    %332 = vmatmul.mubr.bf16.gmra.mxu0 %v227
    %v333 = vpop.f32.mrf.mxu0
    %v334 = vadd.f32 %v249, %v333
    %v335 = vpop.f32.mrf.mxu0
    %v336 = vpop.f32.mrf.mxu0
    %v337 = vpop.f32.mrf.mxu0
    %338 = vdwg.mxu0
    %vm339 = vcmask 58368
    %340 = vst.msk [vmem:[#allocation7] sm:$0x3] %vm339, %v334
    // Predicated region
    $region38: #{tpu_custom_call.1} parent=1 // pred_check
      _
    $region39: #{tpu_custom_call.1} parent=1 // pred_check_branch
      %342 = sbr.rel (0) target = $region41
    $region40: #{tpu_custom_call.1} parent=1 // pred_region
      %s344 = ssub.s32 32, 32
      %345 = vsyncadd [#allocation4], %s344
      %s347 = sshll.u32 [#allocation7], 4
      %s348 = int_to_ptr.vmem [resolvable:$true] %s347
      %350 = dma.vmem_to_hbm [thread:$0]  %s348, 32, %s7, [#allocation4]
    $region41: #{tpu_custom_call.1} parent=1 // pred_fallthru
      _
    // Predicated region
    $region42: #{tpu_custom_call.1} parent=1 // pred_check
      _
    $region43: #{tpu_custom_call.1} parent=1 // pred_check_branch
      %352 = sbr.rel (0) target = $region45
    $region44: #{tpu_custom_call.1} parent=1 // pred_region
      %353 = dma.done [#allocation4], 32
    $region45: #{tpu_custom_call.1} parent=1 // pred_fallthru
      _
    %354 = vsyncpa [#allocation3], 1
    %355 = vsyncpa [#allocation6], 1
    %356 = vsyncpa [#allocation4], 1

// kernel: tpu_custom_call.1
$region0: #{tpu_custom_call.1}
  #allocation0 [shape = 'u32[]', space=smem, size = 0x4, offset = 0x4, fixed_abs, tag = 'smem constant byte address 0x4 - core index']
  #allocation1 [shape = 'u32[144,128]{1,0:T(1,128)}', space=vmem, size = 0x12000, scoped, tag = 'internal scratch']
  %s0 = inlined_call_operand.hbm [shape: f32[2,16], index: 0, kind: input, shape index: {}]
  %s1 = inlined_call_operand.vmem [shape: bf16[16,128], index: 1, kind: input, shape index: {}]
  %s2 = inlined_call_operand.vmem [shape: f32[1,128], index: 2, kind: input, shape index: {}]
  %s3 = inlined_call_operand.vmem [shape: bf16[128,128], index: 3, kind: input, shape index: {}]
  %s4 = inlined_call_operand.hbm [shape: f32[1,128], index: 4, kind: input, shape index: {}]
  %s5 = inlined_call_operand.vmem [shape: bf16[128,8], index: 5, kind: input, shape index: {}]
  %s6 = inlined_call_operand.vmem [shape: f32[1,8], index: 6, kind: input, shape index: {}]
  %s7 = inlined_call_operand.hbm [shape: f32[2,8], index: 7, kind: output, shape index: {}]
  %s8 = sld [smem:[#allocation0]]
  $region46: #{tpu_custom_call.1} parent=0
    _
  %s10 = ssub.s32 1, %s8
  %s11 = scalar_select 0, %s10, %s8
  $region1: #{tpu_custom_call.1} parent=0
    #allocation2 [shape = 'u8[1024]{0}', space=vmem, size = 0x400, scoped, tag = 'input window, operand 0, single buffered']
    #allocation3 [shape = 's32[1]{0}', space=sflag, size = 0x4, scoped, tag = 'scoped memory for tpu_custom_call.1']
    #allocation4 [shape = 's32[1]{0}', space=sflag, size = 0x4, scoped, tag = 'scoped memory for tpu_custom_call.1']
    #allocation5 [shape = 'u8[512]{0}', space=vmem, size = 0x400, scoped, tag = 'input window, operand 4, single buffered']
    #allocation6 [shape = 's32[1]{0}', space=sflag, size = 0x4, scoped, tag = 'scoped memory for tpu_custom_call.1']
    #allocation7 [shape = 'u8[1024]{0}', space=vmem, size = 0x400, scoped, tag = 'output window, operand 0, single buffered']
    %12 = vsyncpa [#allocation3], 0
    %13 = vsyncpa [#allocation6], 0
    %14 = vsyncpa [#allocation4], 0
    // Predicated region
    $region2: #{tpu_custom_call.1} parent=1 // pred_check
      _
    $region3: #{tpu_custom_call.1} parent=1 // pred_check_branch
      %16 = sbr.rel (0) target = $region5
    $region4: #{tpu_custom_call.1} parent=1 // pred_region
      %s18 = ssub.s32 32, 32
      %19 = vsyncadd [#allocation3], %s18
      %s21 = sshll.u32 [#allocation2], 4
      %s22 = int_to_ptr.vmem [resolvable:$true] %s21
      %24 = dma.hbm_to_vmem [thread:$0]  %s0, 32, %s22, [#allocation3]
    $region5: #{tpu_custom_call.1} parent=1 // pred_fallthru
      _
    // Predicated region
    $region6: #{tpu_custom_call.1} parent=1 // pred_check
      _
    $region7: #{tpu_custom_call.1} parent=1 // pred_check_branch
      %26 = sbr.rel (0) target = $region9
    $region8: #{tpu_custom_call.1} parent=1 // pred_region
      _
    $region9: #{tpu_custom_call.1} parent=1 // pred_fallthru
      _
    // Predicated region
    $region10: #{tpu_custom_call.1} parent=1 // pred_check
      _
    $region11: #{tpu_custom_call.1} parent=1 // pred_check_branch
      %28 = sbr.rel (0) target = $region13
    $region12: #{tpu_custom_call.1} parent=1 // pred_region
      _
    $region13: #{tpu_custom_call.1} parent=1 // pred_fallthru
      _
    // Predicated region
    $region14: #{tpu_custom_call.1} parent=1 // pred_check
      _
    $region15: #{tpu_custom_call.1} parent=1 // pred_check_branch
      %30 = sbr.rel (0) target = $region17
    $region16: #{tpu_custom_call.1} parent=1 // pred_region
      _
    $region17: #{tpu_custom_call.1} parent=1 // pred_fallthru
      _
    // Predicated region
    $region18: #{tpu_custom_call.1} parent=1 // pred_check
      _
    $region19: #{tpu_custom_call.1} parent=1 // pred_check_branch
      %32 = sbr.rel (0) target = $region21
    $region20: #{tpu_custom_call.1} parent=1 // pred_region
      %s34 = ssub.s32 16, 16
      %35 = vsyncadd [#allocation6], %s34
      %s37 = sshll.u32 [#allocation5], 4
      %s38 = int_to_ptr.vmem [resolvable:$true] %s37
      %40 = dma.hbm_to_vmem [thread:$0]  %s4, 16, %s38, [#allocation6]
    $region21: #{tpu_custom_call.1} parent=1 // pred_fallthru
      _
    // Predicated region
    $region22: #{tpu_custom_call.1} parent=1 // pred_check
      _
    $region23: #{tpu_custom_call.1} parent=1 // pred_check_branch
      %42 = sbr.rel (0) target = $region25
    $region24: #{tpu_custom_call.1} parent=1 // pred_region
      _
    $region25: #{tpu_custom_call.1} parent=1 // pred_fallthru
      _
    // Predicated region
    $region26: #{tpu_custom_call.1} parent=1 // pred_check
      _
    $region27: #{tpu_custom_call.1} parent=1 // pred_check_branch
      %44 = sbr.rel (0) target = $region29
    $region28: #{tpu_custom_call.1} parent=1 // pred_region
      _
    $region29: #{tpu_custom_call.1} parent=1 // pred_fallthru
      _
    // Predicated region
    $region30: #{tpu_custom_call.1} parent=1 // pred_check
      _
    $region31: #{tpu_custom_call.1} parent=1 // pred_check_branch
      %46 = sbr.rel (0) target = $region33
    $region32: #{tpu_custom_call.1} parent=1 // pred_region
      %47 = dma.done [#allocation3], 32
    $region33: #{tpu_custom_call.1} parent=1 // pred_fallthru
      _
    // Predicated region
    $region34: #{tpu_custom_call.1} parent=1 // pred_check
      _
    $region35: #{tpu_custom_call.1} parent=1 // pred_check_branch
      %49 = sbr.rel (0) target = $region37
    $region36: #{tpu_custom_call.1} parent=1 // pred_region
      %50 = dma.done [#allocation6], 16
    $region37: #{tpu_custom_call.1} parent=1 // pred_fallthru
      _
    %v52 = vld [vmem:[#allocation2] sm:$0x3]
    %v53 = vpack.c.bf16 %v52, %v52
    %v54 = vld [vmem:[%s1] sm:$0xf]
    %v55 = vld [vmem:[%s1 + $0x4] sm:$0xf]
    %v56 = vld [vmem:[%s2] sm:$0x1]
    %v58 = vlaneseq
    %v59 = vshrl.u32 %v58, 7
    %v60 = vsub.s32 0, %v59
    %v61 = vrot.slane %v56, %v60
    %v65 = vunpack.c.l.b16 %v54
    %v66 = vunpack.c.l.b16 %v55
    %v67 = vpack.c.b16 %v66, %v65
    %vm69 = vcmask 130048
    %v71 = vsel %vm69, %v53, 0
    %73 = vmatprep.subr.bf16.mxu0 0
    %74 = vmatpush1.bf16.msra.mxu0 0
    %75 = vmatprep.subr.bf16.mxu0 0
    %76 = vmatpush1.bf16.msra.mxu0 0
    %77 = vmatprep.subr.bf16.mxu0 0
    %78 = vmatpush1.bf16.msra.mxu0 0
    %79 = vmatprep.subr.bf16.mxu0 0
    %80 = vmatpush1.bf16.msra.mxu0 0
    %81 = vmatprep.subr.bf16.mxu0 0
    %82 = vmatpush1.bf16.msra.mxu0 0
    %83 = vmatprep.subr.bf16.mxu0 0
    %84 = vmatpush1.bf16.msra.mxu0 0
    %85 = vmatprep.subr.bf16.mxu0 0
    %86 = vmatpush1.bf16.msra.mxu0 0
    %87 = vmatprep.subr.bf16.mxu0 0
    %88 = vmatpush1.bf16.msra.mxu0 %v67
    %89 = vmatprep.subr.bf16.mxu0 0
    %90 = vmatpush2.bf16.msra.mxu0 0
    %91 = vmatprep.subr.bf16.mxu0 0
    %92 = vmatpush2.bf16.msra.mxu0 0
    %93 = vmatprep.subr.bf16.mxu0 0
    %94 = vmatpush2.bf16.msra.mxu0 0
    %95 = vmatprep.subr.bf16.mxu0 0
    %96 = vmatpush2.bf16.msra.mxu0 0
    %97 = vmatprep.subr.bf16.mxu0 0
    %98 = vmatpush2.bf16.msra.mxu0 0
    %99 = vmatprep.subr.bf16.mxu0 0
    %100 = vmatpush2.bf16.msra.mxu0 0
    %101 = vmatprep.subr.bf16.mxu0 0
    %102 = vmatpush2.bf16.msra.mxu0 0
    %103 = vmatprep.subr.bf16.mxu0 0
    %104 = vmatpush2.bf16.msra.mxu0 0
    %105 = vmatprep.mubr.bf16.mxu0 0
    %106 = vmatmul.mubr.bf16.gmra.mxu0 %v71
    %v107 = vpop.f32.mrf.mxu0
    %v108 = vadd.f32 %v61, %v107
    %v109 = vpop.f32.mrf.mxu0
    %v110 = vpop.f32.mrf.mxu0
    %v111 = vpop.f32.mrf.mxu0
    %112 = vdwg.mxu0
    %v113 = vmax.f32 %v108, 0.0
    %v114 = vpack.c.bf16 %v113, %v113
    %v115 = vld [vmem:[%s3] sm:$0xf]
    %v116 = vld [vmem:[%s3 + $0x4] sm:$0xf]
    %v117 = vld [vmem:[%s3 + $0x8] sm:$0xf]
    %v118 = vld [vmem:[%s3 + $0xc] sm:$0xf]
    %v119 = vld [vmem:[%s3 + $0x10] sm:$0xf]
    %v120 = vld [vmem:[%s3 + $0x14] sm:$0xf]
    %v121 = vld [vmem:[%s3 + $0x18] sm:$0xf]
    %v122 = vld [vmem:[%s3 + $0x1c] sm:$0xf]
    %v123 = vld [vmem:[%s3 + $0x20] sm:$0xf]
    %v124 = vld [vmem:[%s3 + $0x24] sm:$0xf]
    %v125 = vld [vmem:[%s3 + $0x28] sm:$0xf]
    %v126 = vld [vmem:[%s3 + $0x2c] sm:$0xf]
    %v127 = vld [vmem:[%s3 + $0x30] sm:$0xf]
    %v128 = vld [vmem:[%s3 + $0x34] sm:$0xf]
    %v129 = vld [vmem:[%s3 + $0x38] sm:$0xf]
    %v130 = vld [vmem:[%s3 + $0x3c] sm:$0xf]
    %v131 = vld [vmem:[#allocation5] sm:$0x1]
    %v133 = vlaneseq
    %v134 = vshrl.u32 %v133, 7
    %v135 = vsub.s32 0, %v134
    %v136 = vrot.slane %v131, %v135
    %v154 = vunpack.c.l.b16 %v115
    %v155 = vunpack.c.l.b16 %v116
    %v156 = vunpack.c.l.b16 %v117
    %v157 = vunpack.c.l.b16 %v118
    %v158 = vunpack.c.l.b16 %v119
    %v159 = vunpack.c.l.b16 %v120
    %v160 = vunpack.c.l.b16 %v121
    %v161 = vunpack.c.l.b16 %v122
    %v162 = vunpack.c.l.b16 %v123
    %v163 = vunpack.c.l.b16 %v124
    %v164 = vunpack.c.l.b16 %v125
    %v165 = vunpack.c.l.b16 %v126
    %v166 = vunpack.c.l.b16 %v127
    %v167 = vunpack.c.l.b16 %v128
    %v168 = vunpack.c.l.b16 %v129
    %v169 = vunpack.c.l.b16 %v130
    %v170 = vpack.c.b16 %v155, %v154
    %v171 = vpack.c.b16 %v157, %v156
    %v172 = vpack.c.b16 %v159, %v158
    %v173 = vpack.c.b16 %v161, %v160
    %v174 = vpack.c.b16 %v163, %v162
    %v175 = vpack.c.b16 %v165, %v164
    %v176 = vpack.c.b16 %v167, %v166
    %v177 = vpack.c.b16 %v169, %v168
    %186 = vmatprep.subr.bf16.mxu0 0
    %187 = vmatpush1.bf16.msra.mxu0 %v177
    %188 = vmatprep.subr.bf16.mxu0 0
    %189 = vmatpush1.bf16.msra.mxu0 %v176
    %190 = vmatprep.subr.bf16.mxu0 0
    %191 = vmatpush1.bf16.msra.mxu0 %v175
    %192 = vmatprep.subr.bf16.mxu0 0
    %193 = vmatpush1.bf16.msra.mxu0 %v174
    %194 = vmatprep.subr.bf16.mxu0 0
    %195 = vmatpush1.bf16.msra.mxu0 %v173
    %196 = vmatprep.subr.bf16.mxu0 0
    %197 = vmatpush1.bf16.msra.mxu0 %v172
    %198 = vmatprep.subr.bf16.mxu0 0
    %199 = vmatpush1.bf16.msra.mxu0 %v171
    %200 = vmatprep.subr.bf16.mxu0 0
    %201 = vmatpush1.bf16.msra.mxu0 %v170
    %202 = vmatprep.subr.bf16.mxu0 0
    %203 = vmatpush2.bf16.msra.mxu0 0
    %204 = vmatprep.subr.bf16.mxu0 0
    %205 = vmatpush2.bf16.msra.mxu0 0
    %206 = vmatprep.subr.bf16.mxu0 0
    %207 = vmatpush2.bf16.msra.mxu0 0
    %208 = vmatprep.subr.bf16.mxu0 0
    %209 = vmatpush2.bf16.msra.mxu0 0
    %210 = vmatprep.subr.bf16.mxu0 0
    %211 = vmatpush2.bf16.msra.mxu0 0
    %212 = vmatprep.subr.bf16.mxu0 0
    %213 = vmatpush2.bf16.msra.mxu0 0
    %214 = vmatprep.subr.bf16.mxu0 0
    %215 = vmatpush2.bf16.msra.mxu0 0
    %216 = vmatprep.subr.bf16.mxu0 0
    %217 = vmatpush2.bf16.msra.mxu0 0
    %218 = vmatprep.mubr.bf16.mxu0 0
    %219 = vmatmul.mubr.bf16.gmra.mxu0 %v114
    %v220 = vpop.f32.mrf.mxu0
    %v221 = vadd.f32 %v136, %v220
    %v222 = vpop.f32.mrf.mxu0
    %v223 = vpop.f32.mrf.mxu0
    %v224 = vpop.f32.mrf.mxu0
    %225 = vdwg.mxu0
    %v226 = vmax.f32 %v221, 0.0
    %v227 = vpack.c.bf16 %v226, %v226
    %v228 = vld [vmem:[%s5] sm:$0xf]
    %v229 = vld [vmem:[%s5 + $0x4] sm:$0xf]
    %v230 = vld [vmem:[%s5 + $0x8] sm:$0xf]
    %v231 = vld [vmem:[%s5 + $0xc] sm:$0xf]
    %v232 = vld [vmem:[%s5 + $0x10] sm:$0xf]
    %v233 = vld [vmem:[%s5 + $0x14] sm:$0xf]
    %v234 = vld [vmem:[%s5 + $0x18] sm:$0xf]
    %v235 = vld [vmem:[%s5 + $0x1c] sm:$0xf]
    %v236 = vld [vmem:[%s5 + $0x20] sm:$0xf]
    %v237 = vld [vmem:[%s5 + $0x24] sm:$0xf]
    %v238 = vld [vmem:[%s5 + $0x28] sm:$0xf]
    %v239 = vld [vmem:[%s5 + $0x2c] sm:$0xf]
    %v240 = vld [vmem:[%s5 + $0x30] sm:$0xf]
    %v241 = vld [vmem:[%s5 + $0x34] sm:$0xf]
    %v242 = vld [vmem:[%s5 + $0x38] sm:$0xf]
    %v243 = vld [vmem:[%s5 + $0x3c] sm:$0xf]
    %v244 = vld [vmem:[%s6] sm:$0x1]
    %v246 = vlaneseq
    %v247 = vshrl.u32 %v246, 7
    %v248 = vsub.s32 0, %v247
    %v249 = vrot.slane %v244, %v248
    %v267 = vunpack.c.l.b16 %v228
    %v268 = vunpack.c.l.b16 %v229
    %v269 = vunpack.c.l.b16 %v230
    %v270 = vunpack.c.l.b16 %v231
    %v271 = vunpack.c.l.b16 %v232
    %v272 = vunpack.c.l.b16 %v233
    %v273 = vunpack.c.l.b16 %v234
    %v274 = vunpack.c.l.b16 %v235
    %v275 = vunpack.c.l.b16 %v236
    %v276 = vunpack.c.l.b16 %v237
    %v277 = vunpack.c.l.b16 %v238
    %v278 = vunpack.c.l.b16 %v239
    %v279 = vunpack.c.l.b16 %v240
    %v280 = vunpack.c.l.b16 %v241
    %v281 = vunpack.c.l.b16 %v242
    %v282 = vunpack.c.l.b16 %v243
    %v283 = vpack.c.b16 %v268, %v267
    %v284 = vpack.c.b16 %v270, %v269
    %v285 = vpack.c.b16 %v272, %v271
    %v286 = vpack.c.b16 %v274, %v273
    %v287 = vpack.c.b16 %v276, %v275
    %v288 = vpack.c.b16 %v278, %v277
    %v289 = vpack.c.b16 %v280, %v279
    %v290 = vpack.c.b16 %v282, %v281
    %299 = vmatprep.subr.bf16.mxu0 0
    %300 = vmatpush1.bf16.msra.mxu0 %v290
    %301 = vmatprep.subr.bf16.mxu0 0
    %302 = vmatpush1.bf16.msra.mxu0 %v289
    %303 = vmatprep.subr.bf16.mxu0 0
    %304 = vmatpush1.bf16.msra.mxu0 %v288
    %305 = vmatprep.subr.bf16.mxu0 0
    %306 = vmatpush1.bf16.msra.mxu0 %v287
    %307 = vmatprep.subr.bf16.mxu0 0
    %308 = vmatpush1.bf16.msra.mxu0 %v286
    %309 = vmatprep.subr.bf16.mxu0 0
    %310 = vmatpush1.bf16.msra.mxu0 %v285
    %311 = vmatprep.subr.bf16.mxu0 0
    %312 = vmatpush1.bf16.msra.mxu0 %v284
    %313 = vmatprep.subr.bf16.mxu0 0
    %314 = vmatpush1.bf16.msra.mxu0 %v283
    %315 = vmatprep.subr.bf16.mxu0 0
    %316 = vmatpush2.bf16.msra.mxu0 0
    %317 = vmatprep.subr.bf16.mxu0 0
    %318 = vmatpush2.bf16.msra.mxu0 0
    %319 = vmatprep.subr.bf16.mxu0 0
    %320 = vmatpush2.bf16.msra.mxu0 0
    %321 = vmatprep.subr.bf16.mxu0 0
    %322 = vmatpush2.bf16.msra.mxu0 0
    %323 = vmatprep.subr.bf16.mxu0 0
    %324 = vmatpush2.bf16.msra.mxu0 0
    %325 = vmatprep.subr.bf16.mxu0 0
    %326 = vmatpush2.bf16.msra.mxu0 0
    %327 = vmatprep.subr.bf16.mxu0 0
    %328 = vmatpush2.bf16.msra.mxu0 0
    %329 = vmatprep.subr.bf16.mxu0 0
    %330 = vmatpush2.bf16.msra.mxu0 0
    %331 = vmatprep.mubr.bf16.mxu0 0
    %332 = vmatmul.mubr.bf16.gmra.mxu0 %v227
    %v333 = vpop.f32.mrf.mxu0
    %v334 = vadd.f32 %v249, %v333
    %v335 = vpop.f32.mrf.mxu0
    %v336 = vpop.f32.mrf.mxu0
    %v337 = vpop.f32.mrf.mxu0
    %338 = vdwg.mxu0
    %vm339 = vcmask 58368
    %340 = vst.msk [vmem:[#allocation7] sm:$0x3] %vm339, %v334
    // Predicated region
    $region38: #{tpu_custom_call.1} parent=1 // pred_check
      _
    $region39: #{tpu_custom_call.1} parent=1 // pred_check_branch
      %342 = sbr.rel (0) target = $region41
    $region40: #{tpu_custom_call.1} parent=1 // pred_region
      %s344 = ssub.s32 32, 32
      %345 = vsyncadd [#allocation4], %s344
      %s347 = sshll.u32 [#allocation7], 4
      %s348 = int_to_ptr.vmem [resolvable:$true] %s347
      %350 = dma.vmem_to_hbm [thread:$0]  %s348, 32, %s7, [#allocation4]
    $region41: #{tpu_custom_call.1} parent=1 // pred_fallthru
      _
    // Predicated region
    $region42: #{tpu_custom_call.1} parent=1 // pred_check
      _
    $region43: #{tpu_custom_call.1} parent=1 // pred_check_branch
      %352 = sbr.rel (0) target = $region45
    $region44: #{tpu_custom_call.1} parent=1 // pred_region
      %353 = dma.done [#allocation4], 32
    $region45: #{tpu_custom_call.1} parent=1 // pred_fallthru
      _
    %354 = vsyncpa [#allocation3], 1
    %355 = vsyncpa [#allocation6], 1
    %356 = vsyncpa [#allocation4], 1

</llo_original>
